<compile_context>
chip_gen: v5e
topology: v5e:2x2
jax: 0.10.0
libtpu: 0.0.40
codegen_flags: <defaults>
</compile_context>

<pallas_src>
import jax
import jax.numpy as jnp
from jax.experimental import pallas as pl
from jax.experimental.pallas import tpu as pltpu


def time2vec_kernel(x_ref, p_ref, o_ref):
    # x_ref: (TB, TS, F)  VMEM  -- native layout, F on lanes
    # p_ref: (4,  TS)     VMEM  -- [w_lin, b_lin, w_per, b_per] for this S tile
    # o_ref: (2, TB, TS)  VMEM  -- lane-dense output slab (TS on lanes)
    x = x_ref[...].astype(jnp.float32)           # (TB, TS, F)
    m = jnp.mean(x, axis=-1)                     # (TB, TS): lane reduce over F

    w_lin = p_ref[0, :]                          # (TS,)
    b_lin = p_ref[1, :]
    w_per = p_ref[2, :]
    b_per = p_ref[3, :]

    lin = m * w_lin[None, :] + b_lin[None, :]            # (TB, TS)
    per = jnp.sin(m * w_per[None, :] + b_per[None, :])   # (TB, TS)

    # Two dense full-tile stores (TS rides the lane axis).
    o_ref[0, :, :] = lin.astype(o_ref.dtype)
    o_ref[1, :, :] = per.astype(o_ref.dtype)


def _round_up(n, m):
    return ((n + m - 1) // m) * m


def _auto_tiles(B, S, F, itemsize, in_budget):
    def in_tile_bytes(bb, bs):
        # VMEM footprint of one input tile (lanes padded to 128, sublanes to 8).
        return bb * _round_up(bs, 8) * _round_up(F, 128) * itemsize

    # Tile S (in multiples of 128 so param/output lanes stay dense) only when a
    # single batch row over the full S would blow the per-buffer budget.
    if S > 128 and in_tile_bytes(1, S) > in_budget:
        n128 = max(1, in_budget // in_tile_bytes(1, 128))
        block_s = int(min(128 * n128, S))
    else:
        block_s = S

    bb = int(max(1, in_budget // in_tile_bytes(1, block_s)))
    if bb >= B:
        block_b = B
    else:
        # Output block is (2, block_b, block_s): block_b sits on sublanes and
        # must be a multiple of 8 unless it spans the full batch.
        block_b = min(B, max(8, (bb // 8) * 8))

    # Best effort: give the grid >= 4 steps so both v7x TensorCores stream.
    if (pl.cdiv(B, block_b) * pl.cdiv(S, block_s)) < 4 and B >= 32:
        block_b = max(8, ((B // 4) // 8) * 8)

    return block_b, block_s


def time2vec(x, w_lin, b_lin, w_per, b_per, *, block_b=None, block_s=None):
    """x: (B, S, F); params: (S,). Returns (B, S, 2) float32."""
    B, S, F = x.shape
    itemsize = jnp.dtype(x.dtype).itemsize
    params = jnp.stack([w_lin, b_lin, w_per, b_per], axis=0)  # (4, S)

    # Generation-aware VMEM budgeting.
    try:
        info = pltpu.get_tpu_info()
        vmem_cap = int(getattr(info, "vmem_capacity_bytes", 64 << 20))
    except Exception:  # conservative fallback
        vmem_cap = 64 << 20
    if vmem_cap >= (100 << 20):
        in_budget = 12 << 20   # v5e / v6e: 128 MiB physical VMEM
    else:
        in_budget = 8 << 20    # v7x: 64 MiB VMEM per TensorCore

    auto_b, auto_s = _auto_tiles(B, S, F, itemsize, in_budget)
    if block_b is None:
        block_b = auto_b
    if block_s is None:
        block_s = auto_s

    grid = (pl.cdiv(B, block_b), pl.cdiv(S, block_s))

    # Resident VMEM estimate (double-buffered) -> explicit scoped-VMEM limit so
    # v5e's 16 MiB default never rejects the chosen tile.
    in_tile = block_b * _round_up(block_s, 8) * _round_up(F, 128) * itemsize
    out_tile = 2 * _round_up(block_b, 8) * _round_up(block_s, 128) * 4
    par_tile = 8 * _round_up(block_s, 128) * 4
    need = 2 * (in_tile + out_tile + par_tile) + (2 << 20)
    vmem_limit = int(min(max(need, 32 << 20), max(int(0.75 * vmem_cap), 32 << 20)))

    out_2bs = pl.pallas_call(
        time2vec_kernel,
        out_shape=jax.ShapeDtypeStruct((2, B, S), jnp.float32),
        grid_spec=pltpu.PrefetchScalarGridSpec(
            num_scalar_prefetch=0,
            grid=grid,
            in_specs=[
                # Native (B, S, F) block: no HBM pre-transpose.
                pl.BlockSpec((block_b, block_s, F), lambda b, s: (b, s, 0)),
                # Params tile follows the S block; tiny, cheap to (re)fetch.
                pl.BlockSpec((4, block_s), lambda b, s: (0, s)),
            ],
            out_specs=pl.BlockSpec((2, block_b, block_s), lambda b, s: (0, b, s)),
        ),
        compiler_params=pltpu.CompilerParams(
            dimension_semantics=(pltpu.PARALLEL, pltpu.PARALLEL),
            vmem_limit_bytes=vmem_limit,
        ),
        cost_estimate=pl.CostEstimate(
            flops=B * S * F + 5 * B * S,
            transcendentals=B * S,
            bytes_accessed=B * S * F * itemsize + 2 * B * S * 4 + 4 * S * 4,
        ),
    )(x, params)

    # (2, B, S) -> (B, S, 2): tiny layout fixup (2*B*S*4 bytes), kept out of the
    # kernel so all in-kernel stores stay lane-dense.
    return jnp.transpose(out_2bs, (1, 2, 0))


if __name__ == "__main__":
    key = jax.random.PRNGKey(0)

    # --- primary test: shapes implied by the module (batch=2, seq=8, feat=32)
    B, S, F = 2, 8, 32
    k_x, k1, k2, k3, k4 = jax.random.split(key, 5)
    x = jax.random.normal(k_x, (B, S, F), dtype=jnp.float32)
    w_lin = jax.random.normal(k1, (S,), dtype=jnp.float32)
    b_lin = jax.random.normal(k2, (S,), dtype=jnp.float32)
    w_per = jax.random.normal(k3, (S,), dtype=jnp.float32)
    b_per = jax.random.normal(k4, (S,), dtype=jnp.float32)

    m = jnp.mean(x, axis=-1)
    ref = jnp.stack([m * w_lin + b_lin, jnp.sin(m * w_per + b_per)], axis=-1)

    out = jax.block_until_ready(time2vec(x, w_lin, b_lin, w_per, b_per))
    assert out.shape == (B, S, 2)
    assert jnp.allclose(out, ref, atol=1e-5, rtol=1e-5)

    # --- second test: exercise S tiling + ragged (cdiv) batch/seq edge blocks
    B2, S2, F2 = 10, 200, 8
    k_x2, k5, k6, k7, k8 = jax.random.split(jax.random.PRNGKey(1), 5)
    x2 = jax.random.normal(k_x2, (B2, S2, F2), dtype=jnp.float32)
    wl2 = jax.random.normal(k5, (S2,), dtype=jnp.float32)
    bl2 = jax.random.normal(k6, (S2,), dtype=jnp.float32)
    wp2 = jax.random.normal(k7, (S2,), dtype=jnp.float32)
    bp2 = jax.random.normal(k8, (S2,), dtype=jnp.float32)

    m2 = jnp.mean(x2, axis=-1)
    ref2 = jnp.stack([m2 * wl2 + bl2, jnp.sin(m2 * wp2 + bp2)], axis=-1)

    out2 = jax.block_until_ready(
        time2vec(x2, wl2, bl2, wp2, bp2, block_b=8, block_s=128)
    )
    assert out2.shape == (B2, S2, 2)
    assert jnp.allclose(out2, ref2, atol=1e-5, rtol=1e-5)

    print("KERNEL_OK")
</pallas_src>

<mosaic_0001>
module attributes {stable_mosaic.version = 11 : i64} {
  func.func @time2vec_kernel(%arg0: i32, %arg1: i32, %arg2: memref<2x8x32xf32, #tpu.memory_space<vmem>>, %arg3: memref<4x8xf32, #tpu.memory_space<vmem>>, %arg4: memref<2x2x8xf32, #tpu.memory_space<vmem>>) attributes {dimension_semantics = [#tpu.dimension_semantics<parallel>, #tpu.dimension_semantics<parallel>], iteration_bounds = array<i64: 1, 1>, scalar_prefetch = 0 : i64, scratch_operands = 0 : i64, tpu.core_type = #tpu.core_type<tc>, window_params = [{transform_indices = @transform_0, window_bounds = array<i64: 2, 8, 32>}, {transform_indices = @transform_1, window_bounds = array<i64: 4, 8>}, {transform_indices = @transform_2, window_bounds = array<i64: 2, 2, 8>}]} {
    %c0 = arith.constant 0 : index
    %c0_0 = arith.constant 0 : index
    %c0_1 = arith.constant 0 : index
    %0 = vector.load %arg2[%c0, %c0_0, %c0_1] : memref<2x8x32xf32, #tpu.memory_space<vmem>>, vector<2x8x32xf32>
    %cst = arith.constant dense<0.000000e+00> : vector<2x8xf32>
    %1 = vector.multi_reduction <add>, %0, %cst [2] : vector<2x8x32xf32> to vector<2x8xf32>
    %cst_2 = arith.constant 3.200000e+01 : f32
    %2 = vector.broadcast %cst_2 : f32 to vector<2x8xf32>
    %3 = arith.divf %1, %2 : vector<2x8xf32>
    %c0_3 = arith.constant 0 : index
    %c0_4 = arith.constant 0 : index
    %4 = vector.load %arg3[%c0_3, %c0_4] : memref<4x8xf32, #tpu.memory_space<vmem>>, vector<1x8xf32>
    %5 = vector.shape_cast %4 : vector<1x8xf32> to vector<8xf32>
    %c1 = arith.constant 1 : index
    %c0_5 = arith.constant 0 : index
    %6 = vector.load %arg3[%c1, %c0_5] : memref<4x8xf32, #tpu.memory_space<vmem>>, vector<1x8xf32>
    %7 = vector.shape_cast %6 : vector<1x8xf32> to vector<8xf32>
    %c2 = arith.constant 2 : index
    %c0_6 = arith.constant 0 : index
    %8 = vector.load %arg3[%c2, %c0_6] : memref<4x8xf32, #tpu.memory_space<vmem>>, vector<1x8xf32>
    %9 = vector.shape_cast %8 : vector<1x8xf32> to vector<8xf32>
    %c3 = arith.constant 3 : index
    %c0_7 = arith.constant 0 : index
    %10 = vector.load %arg3[%c3, %c0_7] : memref<4x8xf32, #tpu.memory_space<vmem>>, vector<1x8xf32>
    %11 = vector.shape_cast %10 : vector<1x8xf32> to vector<8xf32>
    %12 = vector.shape_cast %5 : vector<8xf32> to vector<1x8xf32>
    %13 = vector.broadcast %12 : vector<1x8xf32> to vector<2x8xf32>
    %14 = arith.mulf %3, %13 : vector<2x8xf32>
    %15 = vector.shape_cast %7 : vector<8xf32> to vector<1x8xf32>
    %16 = vector.broadcast %15 : vector<1x8xf32> to vector<2x8xf32>
    %17 = arith.addf %14, %16 : vector<2x8xf32>
    %18 = vector.shape_cast %9 : vector<8xf32> to vector<1x8xf32>
    %19 = vector.broadcast %18 : vector<1x8xf32> to vector<2x8xf32>
    %20 = arith.mulf %3, %19 : vector<2x8xf32>
    %21 = vector.shape_cast %11 : vector<8xf32> to vector<1x8xf32>
    %22 = vector.broadcast %21 : vector<1x8xf32> to vector<2x8xf32>
    %23 = arith.addf %20, %22 : vector<2x8xf32>
    %24 = math.sin %23 : vector<2x8xf32>
    %c0_8 = arith.constant 0 : index
    %c0_9 = arith.constant 0 : index
    %c0_10 = arith.constant 0 : index
    %25 = vector.load %arg4[%c0_8, %c0_9, %c0_10] : memref<2x2x8xf32, #tpu.memory_space<vmem>>, vector<1x2x8xf32>
    %26 = vector.shape_cast %25 : vector<1x2x8xf32> to vector<2x8xf32>
    %27 = vector.shape_cast %17 : vector<2x8xf32> to vector<1x2x8xf32>
    tpu.vector_store %arg4[%c0_8, %c0_9, %c0_10], %27 {strides = array<i32>} : memref<2x2x8xf32, #tpu.memory_space<vmem>>, vector<1x2x8xf32>,
    %c1_11 = arith.constant 1 : index
    %c0_12 = arith.constant 0 : index
    %c0_13 = arith.constant 0 : index
    %28 = vector.load %arg4[%c1_11, %c0_12, %c0_13] : memref<2x2x8xf32, #tpu.memory_space<vmem>>, vector<1x2x8xf32>
    %29 = vector.shape_cast %28 : vector<1x2x8xf32> to vector<2x8xf32>
    %30 = vector.shape_cast %24 : vector<2x8xf32> to vector<1x2x8xf32>
    tpu.vector_store %arg4[%c1_11, %c0_12, %c0_13], %30 {strides = array<i32>} : memref<2x2x8xf32, #tpu.memory_space<vmem>>, vector<1x2x8xf32>,
    return
  }
  func.func @transform_0(%arg0: i32, %arg1: i32) -> (i32, i32, i32) {
    %c0_i32 = arith.constant 0 : i32
    %c0_i32_0 = arith.constant 0 : i32
    return %arg0, %arg1, %c0_i32 : i32, i32, i32
  }
  func.func @transform_1(%arg0: i32, %arg1: i32) -> (i32, i32) {
    %c0_i32 = arith.constant 0 : i32
    %c0_i32_0 = arith.constant 0 : i32
    return %c0_i32, %arg1 : i32, i32
  }
  func.func @transform_2(%arg0: i32, %arg1: i32) -> (i32, i32, i32) {
    %c0_i32 = arith.constant 0 : i32
    %c0_i32_0 = arith.constant 0 : i32
    return %c0_i32, %arg0, %arg1 : i32, i32, i32
  }
}

</mosaic_0001>

<llo_original>
// kernel: tpu_custom_call.1
$region0: #{tpu_custom_call.1}
  #allocation0 [shape = 'u32[]', space=smem, size = 0x4, offset = 0x4, fixed_abs, tag = 'smem constant byte address 0x4 - core index']
  #allocation1 [shape = 'u32[72,128]{1,0:T(1,128)}', space=vmem, size = 0x9000, scoped, tag = 'internal scratch']
  %s0 = inlined_call_operand.hbm [shape: f32[2,8,32], index: 0, kind: input, shape index: {}]
  %s1 = inlined_call_operand.hbm [shape: f32[4,8], index: 1, kind: input, shape index: {}]
  %s2 = inlined_call_operand.hbm [shape: f32[2,2,8], index: 2, kind: output, shape index: {}]
  %s3 = sld [smem:[#allocation0]]
  $region26: #{tpu_custom_call.1} parent=0
    _
  %s5 = ssub.s32 1, %s3
  %s6 = scalar_select 0, %s5, %s3
  $region1: #{tpu_custom_call.1} parent=0
    #allocation2 [shape = 'u8[8192]{0}', space=vmem, size = 0x2000, scoped, tag = 'input window, operand 0, single buffered']
    #allocation3 [shape = 's32[1]{0}', space=sflag, size = 0x4, scoped, tag = 'scoped memory for tpu_custom_call.1']
    #allocation4 [shape = 's32[1]{0}', space=sflag, size = 0x4, scoped, tag = 'scoped memory for tpu_custom_call.1']
    #allocation5 [shape = 'u8[2048]{0}', space=vmem, size = 0x800, scoped, tag = 'input window, operand 1, single buffered']
    #allocation6 [shape = 's32[1]{0}', space=sflag, size = 0x4, scoped, tag = 'scoped memory for tpu_custom_call.1']
    #allocation7 [shape = 'u8[2048]{0}', space=vmem, size = 0x800, scoped, tag = 'output window, operand 0, single buffered']
    %7 = vsyncpa [#allocation3], 0
    %8 = vsyncpa [#allocation6], 0
    %9 = vsyncpa [#allocation4], 0
    // Predicated region
    $region2: #{tpu_custom_call.1} parent=1 // pred_check
      _
    $region3: #{tpu_custom_call.1} parent=1 // pred_check_branch
      %11 = sbr.rel (0) target = $region5
    $region4: #{tpu_custom_call.1} parent=1 // pred_region
      %13 = vsyncadd [#allocation3], 0
      %s14 = sshll.u32 %s0, 4
      %s15 = int_to_ptr.hbm [resolvable:$true] %s14
      %s16 = sshll.u32 [#allocation2], 4
      %s17 = int_to_ptr.vmem [resolvable:$true] %s16
      %22 = dma.hbm_to_vmem [thread:$0]  %s15, 256, %s17, [#allocation3], 128, 128, 8
    $region5: #{tpu_custom_call.1} parent=1 // pred_fallthru
      _
    // Predicated region
    $region6: #{tpu_custom_call.1} parent=1 // pred_check
      _
    $region7: #{tpu_custom_call.1} parent=1 // pred_check_branch
      %24 = sbr.rel (0) target = $region9
    $region8: #{tpu_custom_call.1} parent=1 // pred_region
      %26 = vsyncadd [#allocation6], 0
      %s28 = sshll.u32 %s1, 4
      %s29 = int_to_ptr.hbm [resolvable:$true] %s28
      %s30 = sshll.u32 [#allocation5], 4
      %s31 = int_to_ptr.vmem [resolvable:$true] %s30
      %33 = dma.hbm_to_vmem [thread:$0]  %s29, 64, %s31, [#allocation6]
    $region9: #{tpu_custom_call.1} parent=1 // pred_fallthru
      _
    // Predicated region
    $region10: #{tpu_custom_call.1} parent=1 // pred_check
      _
    $region11: #{tpu_custom_call.1} parent=1 // pred_check_branch
      %35 = sbr.rel (0) target = $region13
    $region12: #{tpu_custom_call.1} parent=1 // pred_region
      %37 = dma.done [#allocation3], 256
    $region13: #{tpu_custom_call.1} parent=1 // pred_fallthru
      _
    // Predicated region
    $region14: #{tpu_custom_call.1} parent=1 // pred_check
      _
    $region15: #{tpu_custom_call.1} parent=1 // pred_check_branch
      %39 = sbr.rel (0) target = $region17
    $region16: #{tpu_custom_call.1} parent=1 // pred_region
      %41 = dma.done [#allocation6], 64
    $region17: #{tpu_custom_call.1} parent=1 // pred_fallthru
      _
    %v42 = vld [vmem:[#allocation2] sm:$0xff]
    %v43 = vld [vmem:[#allocation2 + $0x8] sm:$0xff]
    %vm44 = vcmask 261120
    %v45 = vsel %vm44, %v42, 0.0
    %46 = vadd.xlane.f32.xlu0 %v45
    %v47 = vpop.xlane.xlu0 %46
    %v48 = vsel %vm44, %v43, 0.0
    %49 = vadd.xlane.f32.xlu0 %v48
    %v50 = vpop.xlane.xlu0 %49
    %v51 = vrcp.pop 32.0
    %v52 = vmul.f32 32.0, %v51
    %v53 = vsub.f32 1.0, %v52
    %v54 = vmul.f32 %v51, %v53
    %v55 = vadd.f32 %v51, %v54
    %vm56 = vweird.f32 %v51
    %v57 = vsel %vm56, %v51, %v55
    %v58 = vmul.f32 %v47, %v57
    %v59 = vmul.f32 %v50, %v57
    %v60 = vld [vmem:[#allocation5] sm:$0x1]
    %v61 = vld [vmem:[#allocation5 + $0x1] sm:$0x1]
    %v62 = vld [vmem:[#allocation5 + $0x2] sm:$0x1]
    %v63 = vld [vmem:[#allocation5 + $0x3] sm:$0x1]
    %v64 = vperm.slane %v60, 0
    %v66 = vlaneseq
    %v67 = vshrl.u32 %v66, 7
    %69 = vset.pattern.permute.xlu0 %v67
    %70 = vperm.xlu0 %69, %v64
    %v71 = vpop.permute.xlu0 %70
    %v73 = vmul.f32 %v58, %v71
    %v74 = vmul.f32 %v59, %v71
    %v75 = vperm.slane %v61, 0
    %v77 = vlaneseq
    %v78 = vshrl.u32 %v77, 7
    %80 = vset.pattern.permute.xlu0 %v78
    %81 = vperm.xlu0 %80, %v75
    %v82 = vpop.permute.xlu0 %81
    %v84 = vadd.f32 %v73, %v82
    %v85 = vadd.f32 %v74, %v82
    %v86 = vperm.slane %v62, 0
    %v88 = vlaneseq
    %v89 = vshrl.u32 %v88, 7
    %91 = vset.pattern.permute.xlu0 %v89
    %92 = vperm.xlu0 %91, %v86
    %v93 = vpop.permute.xlu0 %92
    %v95 = vmul.f32 %v58, %v93
    %v96 = vmul.f32 %v59, %v93
    %v97 = vperm.slane %v63, 0
    %v99 = vlaneseq
    %v100 = vshrl.u32 %v99, 7
    %102 = vset.pattern.permute.xlu0 %v100
    %103 = vperm.xlu0 %102, %v97
    %v104 = vpop.permute.xlu0 %103
    %v106 = vadd.f32 %v95, %v104
    %v107 = vadd.f32 %v96, %v104
    %v108 = vand.u32 2147483647, %v106
    %vm109 = vcmp.le.f32.partialorder %v108, 0.7853982
    %vm110 = vcmp.lt.s32.totalorder %v106, 0
    %v111 = vand.u32 %v106, 2139095040
    %v112 = vshrl.u32 %v111, 23
    %v113 = vsub.s32 %v112, 127
    %v114 = vand.u32 2147483647, %v106
    %v115 = vand.u32 %v114, 8388607
    %v116 = vor.u32 %v115, 8388608
    %v117 = vsub.s32 0, %v116
    %v118 = vadd.s32 %v113, 1
    %vm119 = vcmp.gt.s32.totalorder %v118, 0
    %v120 = vsel %vm119, %v118, 0
    %v121 = vshrl.u32 %v120, 5
    %v122 = vand.u32 %v120, 31
    %v123 = vsub.s32 32, %v122
    %v124 = vshrl.u32 683565275, %v123
    %v125 = vshll.u32 683565275, %v122
    %v126 = vshrl.u32 2475754826, %v123
    %v127 = vor.u32 %v125, %v126
    %v128 = vshll.u32 2475754826, %v122
    %v129 = vshrl.u32 2131351028, %v123
    %v130 = vor.u32 %v128, %v129
    %v131 = vshll.u32 2131351028, %v122
    %v132 = vshrl.u32 2102212464, %v123
    %v133 = vor.u32 %v131, %v132
    %v134 = vshll.u32 2102212464, %v122
    %v135 = vshrl.u32 920167782, %v123
    %v136 = vor.u32 %v134, %v135
    %v137 = vshll.u32 920167782, %v122
    %v138 = vshrl.u32 1326507024, %v123
    %v139 = vor.u32 %v137, %v138
    %vm140 = vcmp.lt.s32.totalorder %v121, 1
    %vm141 = vcmp.lt.s32.totalorder %v121, 2
    %vm142 = vcmp.lt.s32.totalorder %v121, 3
    %vm143 = vcmp.lt.s32.totalorder %v121, 4
    %v144 = vsel %vm140, %v124, %v127
    %v145 = vsel %vm143, %v133, 2102212464
    %v146 = vsel %vm142, %v130, %v145
    %v147 = vsel %vm141, %v144, %v146
    %v148 = vsel %vm140, %v127, %v130
    %v149 = vsel %vm143, %v136, 920167782
    %v150 = vsel %vm142, %v133, %v149
    %v151 = vsel %vm141, %v148, %v150
    %v152 = vsel %vm140, %v130, %v133
    %v153 = vsel %vm143, %v139, 1326507024
    %v154 = vsel %vm142, %v136, %v153
    %v155 = vsel %vm141, %v152, %v154
    %v156 = vshll.u32 %v116, 8
    %v157 = vand.u32 %v156, 65535
    %v158 = vshrl.u32 %v156, 16
    %v159 = vand.u32 %v155, 65535
    %v160 = vshrl.u32 %v155, 16
    %v161 = vmul.u32 %v157, %v159
    %v162 = vmul.u32 %v157, %v160
    %v163 = vmul.u32 %v158, %v159
    %v164 = vmul.u32 %v158, %v160
    %v165 = vshll.u32 %v162, 16
    %v166 = vshrl.u32 %v162, 16
    %v167 = vshll.u32 %v163, 16
    %v168 = vshrl.u32 %v163, 16
    %vm169 = vc.u32 %v161, %v165
    %v170 = vsel %vm169, 1, 0
    %v171 = vadd.s32 %v161, %v165
    %v172 = vadd.s32 %v164, %v170
    %vm173 = vc.u32 %v171, %v167
    %v174 = vsel %vm173, 1, 0
    %v175 = vadd.s32 %v171, %v167
    %v176 = vadd.s32 %v172, %v174
    %v177 = vadd.s32 %v176, %v166
    %v178 = vadd.s32 %v177, %v168
    %v179 = vand.u32 %v156, 65535
    %v180 = vshrl.u32 %v156, 16
    %v181 = vand.u32 %v151, 65535
    %v182 = vshrl.u32 %v151, 16
    %v183 = vmul.u32 %v179, %v181
    %v184 = vmul.u32 %v179, %v182
    %v185 = vmul.u32 %v180, %v181
    %v186 = vmul.u32 %v180, %v182
    %v187 = vshll.u32 %v184, 16
    %v188 = vshrl.u32 %v184, 16
    %v189 = vshll.u32 %v185, 16
    %v190 = vshrl.u32 %v185, 16
    %vm191 = vc.u32 %v183, %v187
    %v192 = vsel %vm191, 1, 0
    %v193 = vadd.s32 %v183, %v187
    %v194 = vadd.s32 %v186, %v192
    %vm195 = vc.u32 %v193, %v189
    %v196 = vsel %vm195, 1, 0
    %v197 = vadd.s32 %v193, %v189
    %v198 = vadd.s32 %v194, %v196
    %v199 = vadd.s32 %v198, %v188
    %v200 = vadd.s32 %v199, %v190
    %v201 = vmul.u32 %v156, %v147
    %v202 = vadd.s32 %v178, %v197
    %vm203 = vc.u32 %v178, %v197
    %v204 = vadd.s32 %v200, 1
    %v205 = vsel %vm203, %v204, %v200
    %v206 = vadd.s32 %v201, %v205
    %v207 = vadd.s32 %v206, 536870912
    %v208 = vshrl.u32 %v207, 30
    %v209 = vshll.u32 %v208, 30
    %v210 = vsub.s32 %v206, %v209
    %vm211 = vcmp.lt.s32.totalorder %v210, 0
    %v212 = vsub.s32 0, %v210
    %v213 = vsel %vm211, %v212, %v210
    %v214 = vclz %v213
    %v215 = vsub.s32 %v214, 2
    %vm216 = vcmp.gt.s32.totalorder 0, %v215
    %v217 = vsel %vm216, 0, %v215
    %v218 = vsub.s32 32, %v217
    %v219 = vshll.u32 %v210, %v217
    %v220 = vshrl.u32 %v202, %v218
    %v221 = vor.u32 %v219, %v220
    %v222 = vsub.s32 4294967266, %v217
    %v223 = vadd.s32 %v222, 127
    %v224 = vshll.u32 %v223, 23
    %v225 = vor.u32 4788187, %v224
    %v226 = vand.u32 2147483647, %v225
    %v228 = vcvt.s32.f32 %v221
    %v229 = vmul.f32 %v228, %v226
    %v230 = vxor.u32 %v229, 2147483648
    %v231 = vsel %vm110, %v230, %v229
    %v232 = vsub.s32 4, %v208
    %v233 = vsel %vm110, %v232, %v208
    %v234 = vsel %vm109, %v106, %v231
    %v235 = vsel %vm109, 0, %v233
    %v236 = vmul.f32 %v234, %v234
    %v237 = vmul.f32 %v236, -0.001358992
    %v238 = vadd.f32 %v237, 0.041655596
    %v239 = vmul.f32 %v236, %v238
    %v240 = vadd.f32 %v239, -0.4999988
    %v241 = vmul.f32 %v236, %v240
    %v242 = vadd.f32 1.0, %v241
    %v243 = vmul.f32 %v234, %v234
    %v244 = vmul.f32 %v243, -0.00019511016
    %v245 = vadd.f32 %v244, 0.008332121
    %v246 = vmul.f32 %v243, %v245
    %v247 = vadd.f32 %v246, -0.16666654
    %v248 = vmul.f32 %v243, %v247
    %v249 = vadd.f32 %v248, 1.0
    %v250 = vmul.f32 %v249, %v234
    %vm251 = vweird.f32 %v106
    %v252 = vadd.s32 %v235, 3
    %v253 = vand.u32 %v252, 3
    %vm254 = vcmp.lt.s32.totalorder %v253, 2
    %vm255 = vcmp.eq.s32.totalorder %v253, 0
    %v256 = vxor.u32 %v250, 2147483648
    %v257 = vsel %vm255, %v242, %v256
    %vm258 = vcmp.eq.s32.totalorder %v253, 2
    %v259 = vxor.u32 %v242, 2147483648
    %v260 = vsel %vm258, %v259, %v250
    %v261 = vsel %vm254, %v257, %v260
    %v262 = vsel %vm251, nan, %v261
    %v263 = vand.u32 2147483647, %v107
    %vm264 = vcmp.le.f32.partialorder %v263, 0.7853982
    %vm265 = vcmp.lt.s32.totalorder %v107, 0
    %v266 = vand.u32 %v107, 2139095040
    %v267 = vshrl.u32 %v266, 23
    %v268 = vsub.s32 %v267, 127
    %v269 = vand.u32 2147483647, %v107
    %v270 = vand.u32 %v269, 8388607
    %v271 = vor.u32 %v270, 8388608
    %v272 = vsub.s32 0, %v271
    %v273 = vadd.s32 %v268, 1
    %vm274 = vcmp.gt.s32.totalorder %v273, 0
    %v275 = vsel %vm274, %v273, 0
    %v276 = vshrl.u32 %v275, 5
    %v277 = vand.u32 %v275, 31
    %v278 = vsub.s32 32, %v277
    %v279 = vshrl.u32 683565275, %v278
    %v280 = vshll.u32 683565275, %v277
    %v281 = vshrl.u32 2475754826, %v278
    %v282 = vor.u32 %v280, %v281
    %v283 = vshll.u32 2475754826, %v277
    %v284 = vshrl.u32 2131351028, %v278
    %v285 = vor.u32 %v283, %v284
    %v286 = vshll.u32 2131351028, %v277
    %v287 = vshrl.u32 2102212464, %v278
    %v288 = vor.u32 %v286, %v287
    %v289 = vshll.u32 2102212464, %v277
    %v290 = vshrl.u32 920167782, %v278
    %v291 = vor.u32 %v289, %v290
    %v292 = vshll.u32 920167782, %v277
    %v293 = vshrl.u32 1326507024, %v278
    %v294 = vor.u32 %v292, %v293
    %vm295 = vcmp.lt.s32.totalorder %v276, 1
    %vm296 = vcmp.lt.s32.totalorder %v276, 2
    %vm297 = vcmp.lt.s32.totalorder %v276, 3
    %vm298 = vcmp.lt.s32.totalorder %v276, 4
    %v299 = vsel %vm295, %v279, %v282
    %v300 = vsel %vm298, %v288, 2102212464
    %v301 = vsel %vm297, %v285, %v300
    %v302 = vsel %vm296, %v299, %v301
    %v303 = vsel %vm295, %v282, %v285
    %v304 = vsel %vm298, %v291, 920167782
    %v305 = vsel %vm297, %v288, %v304
    %v306 = vsel %vm296, %v303, %v305
    %v307 = vsel %vm295, %v285, %v288
    %v308 = vsel %vm298, %v294, 1326507024
    %v309 = vsel %vm297, %v291, %v308
    %v310 = vsel %vm296, %v307, %v309
    %v311 = vshll.u32 %v271, 8
    %v312 = vand.u32 %v311, 65535
    %v313 = vshrl.u32 %v311, 16
    %v314 = vand.u32 %v310, 65535
    %v315 = vshrl.u32 %v310, 16
    %v316 = vmul.u32 %v312, %v314
    %v317 = vmul.u32 %v312, %v315
    %v318 = vmul.u32 %v313, %v314
    %v319 = vmul.u32 %v313, %v315
    %v320 = vshll.u32 %v317, 16
    %v321 = vshrl.u32 %v317, 16
    %v322 = vshll.u32 %v318, 16
    %v323 = vshrl.u32 %v318, 16
    %vm324 = vc.u32 %v316, %v320
    %v325 = vsel %vm324, 1, 0
    %v326 = vadd.s32 %v316, %v320
    %v327 = vadd.s32 %v319, %v325
    %vm328 = vc.u32 %v326, %v322
    %v329 = vsel %vm328, 1, 0
    %v330 = vadd.s32 %v326, %v322
    %v331 = vadd.s32 %v327, %v329
    %v332 = vadd.s32 %v331, %v321
    %v333 = vadd.s32 %v332, %v323
    %v334 = vand.u32 %v311, 65535
    %v335 = vshrl.u32 %v311, 16
    %v336 = vand.u32 %v306, 65535
    %v337 = vshrl.u32 %v306, 16
    %v338 = vmul.u32 %v334, %v336
    %v339 = vmul.u32 %v334, %v337
    %v340 = vmul.u32 %v335, %v336
    %v341 = vmul.u32 %v335, %v337
    %v342 = vshll.u32 %v339, 16
    %v343 = vshrl.u32 %v339, 16
    %v344 = vshll.u32 %v340, 16
    %v345 = vshrl.u32 %v340, 16
    %vm346 = vc.u32 %v338, %v342
    %v347 = vsel %vm346, 1, 0
    %v348 = vadd.s32 %v338, %v342
    %v349 = vadd.s32 %v341, %v347
    %vm350 = vc.u32 %v348, %v344
    %v351 = vsel %vm350, 1, 0
    %v352 = vadd.s32 %v348, %v344
    %v353 = vadd.s32 %v349, %v351
    %v354 = vadd.s32 %v353, %v343
    %v355 = vadd.s32 %v354, %v345
    %v356 = vmul.u32 %v311, %v302
    %v357 = vadd.s32 %v333, %v352
    %vm358 = vc.u32 %v333, %v352
    %v359 = vadd.s32 %v355, 1
    %v360 = vsel %vm358, %v359, %v355
    %v361 = vadd.s32 %v356, %v360
    %v362 = vadd.s32 %v361, 536870912
    %v363 = vshrl.u32 %v362, 30
    %v364 = vshll.u32 %v363, 30
    %v365 = vsub.s32 %v361, %v364
    %vm366 = vcmp.lt.s32.totalorder %v365, 0
    %v367 = vsub.s32 0, %v365
    %v368 = vsel %vm366, %v367, %v365
    %v369 = vclz %v368
    %v370 = vsub.s32 %v369, 2
    %vm371 = vcmp.gt.s32.totalorder 0, %v370
    %v372 = vsel %vm371, 0, %v370
    %v373 = vsub.s32 32, %v372
    %v374 = vshll.u32 %v365, %v372
    %v375 = vshrl.u32 %v357, %v373
    %v376 = vor.u32 %v374, %v375
    %v377 = vsub.s32 4294967266, %v372
    %v378 = vadd.s32 %v377, 127
    %v379 = vshll.u32 %v378, 23
    %v380 = vor.u32 4788187, %v379
    %v381 = vand.u32 2147483647, %v380
    %v383 = vcvt.s32.f32 %v376
    %v384 = vmul.f32 %v383, %v381
    %v385 = vxor.u32 %v384, 2147483648
    %v386 = vsel %vm265, %v385, %v384
    %v387 = vsub.s32 4, %v363
    %v388 = vsel %vm265, %v387, %v363
    %v389 = vsel %vm264, %v107, %v386
    %v390 = vsel %vm264, 0, %v388
    %v391 = vmul.f32 %v389, %v389
    %v392 = vmul.f32 %v391, -0.001358992
    %v393 = vadd.f32 %v392, 0.041655596
    %v394 = vmul.f32 %v391, %v393
    %v395 = vadd.f32 %v394, -0.4999988
    %v396 = vmul.f32 %v391, %v395
    %v397 = vadd.f32 1.0, %v396
    %v398 = vmul.f32 %v389, %v389
    %v399 = vmul.f32 %v398, -0.00019511016
    %v400 = vadd.f32 %v399, 0.008332121
    %v401 = vmul.f32 %v398, %v400
    %v402 = vadd.f32 %v401, -0.16666654
    %v403 = vmul.f32 %v398, %v402
    %v404 = vadd.f32 %v403, 1.0
    %v405 = vmul.f32 %v404, %v389
    %vm406 = vweird.f32 %v107
    %v407 = vadd.s32 %v390, 3
    %v408 = vand.u32 %v407, 3
    %vm409 = vcmp.lt.s32.totalorder %v408, 2
    %vm410 = vcmp.eq.s32.totalorder %v408, 0
    %v411 = vxor.u32 %v405, 2147483648
    %v412 = vsel %vm410, %v397, %v411
    %vm413 = vcmp.eq.s32.totalorder %v408, 2
    %v414 = vxor.u32 %v397, 2147483648
    %v415 = vsel %vm413, %v414, %v405
    %v416 = vsel %vm409, %v412, %v415
    %v417 = vsel %vm406, nan, %v416
    %420 = vset.pattern.permute.xlu0 0
    %421 = vperm.xlu0 %420, %v84
    %v422 = vpop.permute.xlu0 %421
    %423 = vset.pattern.permute.xlu0 0
    %424 = vperm.xlu0 %423, %v85
    %v425 = vpop.permute.xlu0 %424
    %v426 = vlaneseq
    %v427 = vand.u32 %v426, 127
    %v428 = vperm.slane %v422, %v427
    %v429 = vperm.slane %v425, %v427
    %vm430 = vcmask 1041409
    %v431 = vsel %vm430, %v429, %v428
    %vm433 = vcmask 58368
    %434 = vst.msk [vmem:[#allocation7] sm:$0x3] %vm433, %v431
    %437 = vset.pattern.permute.xlu0 0
    %438 = vperm.xlu0 %437, %v262
    %v439 = vpop.permute.xlu0 %438
    %440 = vset.pattern.permute.xlu0 0
    %441 = vperm.xlu0 %440, %v417
    %v442 = vpop.permute.xlu0 %441
    %v443 = vperm.slane %v439, %v427
    %v444 = vperm.slane %v442, %v427
    %v445 = vsel %vm430, %v444, %v443
    %s447 = scalar_lea.vmem [#allocation7], 2
    %448 = vst.msk [vmem:[%s447] sm:$0x3] %vm433, %v445
    // Predicated region
    $region18: #{tpu_custom_call.1} parent=1 // pred_check
      _
    $region19: #{tpu_custom_call.1} parent=1 // pred_check_branch
      %450 = sbr.rel (0) target = $region21
    $region20: #{tpu_custom_call.1} parent=1 // pred_region
      %452 = vsyncadd [#allocation4], 0
      %s453 = sshll.u32 [#allocation7], 4
      %s454 = int_to_ptr.vmem [resolvable:$true] %s453
      %s455 = sshll.u32 %s2, 4
      %s456 = int_to_ptr.hbm [resolvable:$true] %s455
      %461 = dma.vmem_to_hbm [thread:$0]  %s454, 64, %s456, [#allocation4], 32, 32, 2
    $region21: #{tpu_custom_call.1} parent=1 // pred_fallthru
      _
    // Predicated region
    $region22: #{tpu_custom_call.1} parent=1 // pred_check
      _
    $region23: #{tpu_custom_call.1} parent=1 // pred_check_branch
      %463 = sbr.rel (0) target = $region25
    $region24: #{tpu_custom_call.1} parent=1 // pred_region
      %465 = dma.done [#allocation4], 64
    $region25: #{tpu_custom_call.1} parent=1 // pred_fallthru
      _
    %466 = vsyncpa [#allocation3], 1
    %467 = vsyncpa [#allocation6], 1
    %468 = vsyncpa [#allocation4], 1

</llo_original>
